<compile_context>
chip_gen: v7x
topology: tpu7x:2x2x1
jax: 0.10.0
libtpu: 0.0.40
codegen_flags: <defaults>
</compile_context>

<pallas_src>
import functools

import jax
import jax.numpy as jnp
import numpy as np
from jax.experimental import pallas as pl
from jax.experimental.pallas import tpu as pltpu


def _lsr_ce_partial_kernel(pre_ref, label_ref, out_ref, *, coef_hit, coef_miss,
                           batch, tb, class_axis, ragged):
    """Summed smoothed-CE loss of one batch tile.

    Layouts (static `class_axis`):
      class_axis == 1: pre (TB, C), label (TB, 1)   [classes lane-dense, C >= 128]
      class_axis == 0: pre (C, TB), label (1, TB)   [batch lane-dense, small C]
    """
    x = pre_ref[...].astype(jnp.float32)
    labels = label_ref[...]                       # int32, broadcasts against iota
    batch_axis = 1 - class_axis

    # Smoothed one-hot weights, fused into a single weighted reduction.
    cls_idx = jax.lax.broadcasted_iota(jnp.int32, x.shape, dimension=class_axis)
    w = jnp.where(cls_idx == labels, jnp.float32(coef_hit), jnp.float32(coef_miss))

    # Numerically stable log-sum-exp pieces (no log_softmax materialized).
    m = jnp.max(x, axis=class_axis, keepdims=True)
    lse = jnp.log(jnp.sum(jnp.exp(x - m), axis=class_axis, keepdims=True))
    wsum = jnp.sum(w * x, axis=class_axis, keepdims=True)

    loss = m + lse - wsum                         # (TB,1) or (1,TB)

    if ragged:
        # Padded batch entries (zero logits/labels from the wrapper pad) are
        # excluded with a cheap per-row mask; no full-tile masking needed.
        i = pl.program_id(0)
        pos = jax.lax.broadcasted_iota(jnp.int32, loss.shape,
                                       dimension=batch_axis) + i * tb
        loss = jnp.where(pos < batch, loss, jnp.float32(0.0))

    out_ref[...] = jnp.sum(loss, keepdims=True).reshape(1, 1, 1)


def _vmem_limit_bytes():
    """Per-generation VMEM limit (v5e/v6e: 128 MiB phys -> 96 MiB; v7x: 64 -> 48)."""
    cap = 64 * 1024 * 1024  # conservative floor (v7x per-TensorCore)
    try:
        info = pltpu.get_tpu_info()
        cap = int(getattr(info, "vmem_capacity_bytes", cap))
    except Exception:
        pass
    return min((cap * 3) // 4, 96 * 1024 * 1024)


def _pick_batch_tile(b, c, itemsize, align, vmem_budget_bytes):
    """Batch elements per tile.

    Per-element VMEM cost = double-buffered input (2*C*itemsize) plus ~4 f32
    C-wide in-kernel temporaries (f32 copy, class iota, weights, exp).
    """
    per_elem = 2 * c * itemsize + 4 * c * 4
    tb = int(vmem_budget_bytes // max(1, per_elem))
    tb = min(tb, 8192)

    if b >= 2 * align:
        # Guarantee >= 2 grid blocks so v7x's second TensorCore is used.
        half = (((b + 1) // 2) + align - 1) // align * align
        tb = min(tb, half)

    if tb >= b:
        return b                                   # single full-extent block
    return max(align, (tb // align) * align)


def cross_entropy_loss_lsr(pre, label, para_lsr=0.2, size_average=True):
    """pre: (B, C) float logits; label: (B,) int class indices. Returns scalar."""
    b, c = pre.shape
    label_i32 = label.astype(jnp.int32)
    itemsize = jnp.dtype(pre.dtype).itemsize

    classes_last = c >= 128          # lane-dense classes only when C fills lanes
    align = 8 if classes_last else 128
    vmem_limit = _vmem_limit_bytes()
    tb = _pick_batch_tile(b, c, itemsize, align, (vmem_limit * 4) // 5)
    nblocks = -(-b // tb)
    b_pad = nblocks * tb
    ragged = b_pad != b

    if classes_last:
        x_in = pre
        lab_in = label_i32.reshape(b, 1)
        if ragged:
            x_in = jnp.pad(x_in, ((0, b_pad - b), (0, 0)))
            lab_in = jnp.pad(lab_in, ((0, b_pad - b), (0, 0)))
        in_specs = [pl.BlockSpec((tb, c), lambda i: (i, 0)),
                    pl.BlockSpec((tb, 1), lambda i: (i, 0))]
        class_axis = 1
    else:
        # Small-C fast path: batch on the 128-lane axis, classes on sublanes.
        x_in = pre.T                              # (C, B)
        lab_in = label_i32.reshape(1, b)
        if ragged:
            x_in = jnp.pad(x_in, ((0, 0), (0, b_pad - b)))
            lab_in = jnp.pad(lab_in, ((0, 0), (0, b_pad - b)))
        in_specs = [pl.BlockSpec((c, tb), lambda i: (0, i)),
                    pl.BlockSpec((1, tb), lambda i: (0, i))]
        class_axis = 0

    coef_miss = float(para_lsr) / float(c)
    coef_hit = coef_miss + (1.0 - float(para_lsr))

    kernel = functools.partial(
        _lsr_ce_partial_kernel,
        coef_hit=coef_hit, coef_miss=coef_miss,
        batch=b, tb=tb, class_axis=class_axis, ragged=ragged)

    partials = pl.pallas_call(
        kernel,
        grid=(nblocks,),
        out_shape=jax.ShapeDtypeStruct((nblocks, 1, 1), jnp.float32),
        in_specs=in_specs,
        out_specs=pl.BlockSpec((1, 1, 1), lambda i: (i, 0, 0)),
        compiler_params=pltpu.CompilerParams(
            dimension_semantics=("parallel",),
            vmem_limit_bytes=vmem_limit),
    )(x_in, lab_in)

    total = jnp.sum(partials)
    if size_average:
        total = total / jnp.float32(b)
    return total


def _reference(pre, label, para_lsr=0.2, size_average=True):
    b, c = pre.shape
    log_sm = jax.nn.log_softmax(pre.astype(jnp.float32), axis=-1)
    one_hot = jax.nn.one_hot(label, c, dtype=jnp.float32) * (1.0 - para_lsr)
    one_hot = one_hot + para_lsr / c
    loss = jnp.sum(-one_hot * log_sm, axis=1)
    return jnp.mean(loss) if size_average else jnp.sum(loss)


if __name__ == "__main__":
    key = jax.random.PRNGKey(0)
    k_pre, k_lab, k_pre2, k_lab2 = jax.random.split(key, 4)

    # ABSA-style shapes: batch=8, 3 sentiment classes (small-C lane-dense path).
    B, C = 8, 3
    pre = jax.random.normal(k_pre, (B, C), dtype=jnp.float32)
    label = jax.random.randint(k_lab, (B,), 0, C, dtype=jnp.int32)

    out = jax.block_until_ready(
        cross_entropy_loss_lsr(pre, label, para_lsr=0.2, size_average=True))
    ref = _reference(pre, label, para_lsr=0.2, size_average=True)
    np.testing.assert_allclose(np.asarray(out), np.asarray(ref),
                               rtol=1e-5, atol=1e-5)

    out_sum = jax.block_until_ready(
        cross_entropy_loss_lsr(pre, label, para_lsr=0.2, size_average=False))
    ref_sum = _reference(pre, label, para_lsr=0.2, size_average=False)
    np.testing.assert_allclose(np.asarray(out_sum), np.asarray(ref_sum),
                               rtol=1e-5, atol=1e-5)

    # Also exercise the classes-last path with a ragged, multi-block grid
    # (B=24, C=256 -> 2 blocks of 16 rows, last tile padded).
    B2, C2 = 24, 256
    pre2 = jax.random.normal(k_pre2, (B2, C2), dtype=jnp.float32)
    label2 = jax.random.randint(k_lab2, (B2,), 0, C2, dtype=jnp.int32)
    out2 = jax.block_until_ready(
        cross_entropy_loss_lsr(pre2, label2, para_lsr=0.2, size_average=True))
    ref2 = _reference(pre2, label2, para_lsr=0.2, size_average=True)
    np.testing.assert_allclose(np.asarray(out2), np.asarray(ref2),
                               rtol=1e-5, atol=1e-5)

    print("KERNEL_OK")
</pallas_src>

<mosaic_0001>
module attributes {stable_mosaic.version = 11 : i64} {
  func.func @_lsr_ce_partial_kernel(%arg0: i32, %arg1: memref<3x8xf32, #tpu.memory_space<vmem>>, %arg2: memref<1x8xi32, #tpu.memory_space<vmem>>, %arg3: memref<1x1x1xf32, #tpu.memory_space<vmem>>) attributes {dimension_semantics = [#tpu.dimension_semantics<parallel>], iteration_bounds = array<i64: 1>, scalar_prefetch = 0 : i64, scratch_operands = 0 : i64, tpu.core_type = #tpu.core_type<tc>, window_params = [{transform_indices = @transform_0, window_bounds = array<i64: 3, 8>}, {transform_indices = @transform_1, window_bounds = array<i64: 1, 8>}, {transform_indices = @transform_2, window_bounds = array<i64: 1, 1, 1>}]} {
    %c0 = arith.constant 0 : index
    %c0_0 = arith.constant 0 : index
    %0 = vector.load %arg1[%c0, %c0_0] : memref<3x8xf32, #tpu.memory_space<vmem>>, vector<3x8xf32>
    %c0_1 = arith.constant 0 : index
    %c0_2 = arith.constant 0 : index
    %1 = vector.load %arg2[%c0_1, %c0_2] : memref<1x8xi32, #tpu.memory_space<vmem>>, vector<1x8xi32>
    %2 = tpu.iota {dimensions = array<i32: 0>} : vector<3x8xi32>
    %3 = vector.broadcast %1 : vector<1x8xi32> to vector<3x8xi32>
    %4 = arith.cmpi eq, %2, %3 : vector<3x8xi32>
    %cst = arith.constant 0.866666674 : f32
    %cst_3 = arith.constant 0.0666666701 : f32
    %5 = vector.broadcast %cst : f32 to vector<3x8xf32>
    %6 = vector.broadcast %cst_3 : f32 to vector<3x8xf32>
    %7 = arith.select %4, %5, %6 : vector<3x8xi1>, vector<3x8xf32>
    %cst_4 = arith.constant dense<0xFF800000> : vector<8xf32>
    %8 = vector.multi_reduction <maximumf>, %0, %cst_4 [0] : vector<3x8xf32> to vector<8xf32>
    %9 = vector.shape_cast %8 : vector<8xf32> to vector<1x8xf32>
    %10 = vector.broadcast %9 : vector<1x8xf32> to vector<3x8xf32>
    %11 = arith.subf %0, %10 : vector<3x8xf32>
    %12 = math.exp %11 : vector<3x8xf32>
    %cst_5 = arith.constant dense<0.000000e+00> : vector<8xf32>
    %13 = vector.multi_reduction <add>, %12, %cst_5 [0] : vector<3x8xf32> to vector<8xf32>
    %14 = vector.shape_cast %13 : vector<8xf32> to vector<1x8xf32>
    %15 = math.log %14 : vector<1x8xf32>
    %16 = arith.mulf %7, %0 : vector<3x8xf32>
    %cst_6 = arith.constant dense<0.000000e+00> : vector<8xf32>
    %17 = vector.multi_reduction <add>, %16, %cst_6 [0] : vector<3x8xf32> to vector<8xf32>
    %18 = vector.shape_cast %17 : vector<8xf32> to vector<1x8xf32>
    %19 = arith.addf %9, %15 : vector<1x8xf32>
    %20 = arith.subf %19, %18 : vector<1x8xf32>
    %21 = vector.shape_cast %20 : vector<1x8xf32> to vector<1x1x8xf32>
    %cst_7 = arith.constant dense<0.000000e+00> : vector<1xf32>
    %22 = vector.multi_reduction <add>, %21, %cst_7 [1, 2] : vector<1x1x8xf32> to vector<1xf32>
    %23 = vector.shape_cast %22 : vector<1xf32> to vector<1x1x1xf32>
    %24 = vector.extract %23[0, 0, 0] : f32 from vector<1x1x1xf32>
    %25 = vector.broadcast %24 : f32 to vector<1x1xf32>
    %26 = vector.shape_cast %25 : vector<1x1xf32> to vector<1x1x1xf32>
    %c0_8 = arith.constant 0 : index
    %c0_9 = arith.constant 0 : index
    %c0_10 = arith.constant 0 : index
    %27 = vector.load %arg3[%c0_8, %c0_9, %c0_10] : memref<1x1x1xf32, #tpu.memory_space<vmem>>, vector<1x1x1xf32>
    tpu.vector_store %arg3[%c0_8, %c0_9, %c0_10], %26 {strides = array<i32>} : memref<1x1x1xf32, #tpu.memory_space<vmem>>, vector<1x1x1xf32>,
    return
  }
  func.func @transform_0(%arg0: i32) -> (i32, i32) {
    %c0_i32 = arith.constant 0 : i32
    %c0_i32_0 = arith.constant 0 : i32
    return %c0_i32, %arg0 : i32, i32
  }
  func.func @transform_1(%arg0: i32) -> (i32, i32) {
    %c0_i32 = arith.constant 0 : i32
    %c0_i32_0 = arith.constant 0 : i32
    return %c0_i32, %arg0 : i32, i32
  }
  func.func @transform_2(%arg0: i32) -> (i32, i32, i32) {
    %c0_i32 = arith.constant 0 : i32
    %c0_i32_0 = arith.constant 0 : i32
    %c0_i32_1 = arith.constant 0 : i32
    return %arg0, %c0_i32, %c0_i32_0 : i32, i32, i32
  }
}

</mosaic_0001>

<llo_original>
// kernel: tpu_custom_call.1
$region0: #{tpu_custom_call.1}
  #allocation0 [shape = 'u32[]', space=smem, size = 0x4, offset = 0x4, fixed_abs, tag = 'smem constant byte address 0x4 - core index']
  #allocation1 [shape = 'u32[144,128]{1,0:T(1,128)}', space=vmem, size = 0x12000, scoped, tag = 'internal scratch']
  %s0 = inlined_call_operand.hbm [shape: f32[3,8], index: 0, kind: input, shape index: {}]
  %s1 = inlined_call_operand.vmem [shape: s32[1,8], index: 1, kind: input, shape index: {}]
  %s2 = inlined_call_operand.hbm [shape: f32[1,1,1], index: 2, kind: output, shape index: {}]
  %s3 = sld [smem:[#allocation0]]
  $region22: #{tpu_custom_call.1} parent=0
    _
  %s5 = ssub.s32 1, %s3
  %s6 = scalar_select 0, %s5, %s3
  $region1: #{tpu_custom_call.1} parent=0
    #allocation2 [shape = 'u8[2048]{0}', space=vmem, size = 0x800, scoped, tag = 'input window, operand 0, single buffered']
    #allocation3 [shape = 's32[1]{0}', space=sflag, size = 0x4, scoped, tag = 'scoped memory for tpu_custom_call.1']
    #allocation4 [shape = 's32[1]{0}', space=sflag, size = 0x4, scoped, tag = 'scoped memory for tpu_custom_call.1']
    #allocation5 [shape = 'u8[512]{0}', space=vmem, size = 0x400, scoped, tag = 'output window, operand 0, single buffered']
    %7 = vsyncpa [#allocation3], 0
    %8 = vsyncpa [#allocation4], 0
    // Predicated region
    $region2: #{tpu_custom_call.1} parent=1 // pred_check
      _
    $region3: #{tpu_custom_call.1} parent=1 // pred_check_branch
      %10 = sbr.rel (0) target = $region5
    $region4: #{tpu_custom_call.1} parent=1 // pred_region
      %s12 = ssub.s32 64, 64
      %13 = vsyncadd [#allocation3], %s12
      %s15 = sshll.u32 [#allocation2], 4
      %s16 = int_to_ptr.vmem [resolvable:$true] %s15
      %18 = dma.hbm_to_vmem [thread:$0]  %s0, 64, %s16, [#allocation3]
    $region5: #{tpu_custom_call.1} parent=1 // pred_fallthru
      _
    // Predicated region
    $region6: #{tpu_custom_call.1} parent=1 // pred_check
      _
    $region7: #{tpu_custom_call.1} parent=1 // pred_check_branch
      %20 = sbr.rel (0) target = $region9
    $region8: #{tpu_custom_call.1} parent=1 // pred_region
      _
    $region9: #{tpu_custom_call.1} parent=1 // pred_fallthru
      _
    // Predicated region
    $region10: #{tpu_custom_call.1} parent=1 // pred_check
      _
    $region11: #{tpu_custom_call.1} parent=1 // pred_check_branch
      %22 = sbr.rel (0) target = $region13
    $region12: #{tpu_custom_call.1} parent=1 // pred_region
      %23 = dma.done [#allocation3], 64
    $region13: #{tpu_custom_call.1} parent=1 // pred_fallthru
      _
    %v24 = vld [vmem:[#allocation2] sm:$0x7]
    %v25 = vld [vmem:[%s1] sm:$0x1]
    %v26 = vlaneseq
    %v27 = vshrl.u32 %v26, 7
    %v28 = vlaneseq
    %v29 = vshrl.u32 %v28, 7
    %v30 = vsub.s32 0, %v29
    %v31 = vrot.slane %v25, %v30
    %vm32 = vcmp.eq.s32.totalorder %v27, %v31
    %v33 = vsel %vm32, 0.8666667, 0.06666667
    %vm34 = vcmask 59392
    %v35 = vsel %vm34, %v24, -inf
    %v36 = vrot.slane %v35, 4
    %v37 = vmax.f32 %v35, %v36
    %v38 = vrot.slane %v37, 2
    %v39 = vmax.f32 %v37, %v38
    %v40 = vrot.slane %v39, 1
    %v41 = vmax.f32 %v39, %v40
    %v42 = vsub.f32 %v24, %v41
    %v43 = vmul.f32 %v42, 1.442695
    %v44 = vpow.pop %v43
    %v45 = vsel %vm34, %v44, 0.0
    %v46 = vrot.slane %v45, 4
    %v47 = vadd.f32 %v45, %v46
    %v48 = vrot.slane %v47, 2
    %v49 = vadd.f32 %v47, %v48
    %v50 = vrot.slane %v49, 1
    %v51 = vadd.f32 %v49, %v50
    %v52 = vlog2.pop %v51
    %v53 = vmul.f32 %v52, 0.6931472
    %v54 = vmul.f32 %v33, %v24
    %v55 = vsel %vm34, %v54, 0.0
    %v56 = vrot.slane %v55, 4
    %v57 = vadd.f32 %v55, %v56
    %v58 = vrot.slane %v57, 2
    %v59 = vadd.f32 %v57, %v58
    %v60 = vrot.slane %v59, 1
    %v61 = vadd.f32 %v59, %v60
    %v62 = vadd.f32 %v41, %v53
    %v63 = vsub.f32 %v62, %v61
    %vm64 = vcmask 57344
    %v65 = vsel %vm64, %v63, 0.0
    %66 = vadd.xlane.f32.xlu0 %v65
    %v67 = vpop.xlane.xlu0 %66
    %v68 = vrot.slane %v67, 4
    %v69 = vadd.f32 %v67, %v68
    %v70 = vrot.slane %v69, 2
    %v71 = vadd.f32 %v69, %v70
    %v72 = vrot.slane %v71, 1
    %v73 = vadd.f32 %v71, %v72
    %s74 = vtos %v73
    %v75 = vstv %s74
    %vm76 = vcmask 0
    %77 = vst.msk [vmem:[#allocation5] sm:$0x1] %vm76, %v75
    // Predicated region
    $region14: #{tpu_custom_call.1} parent=1 // pred_check
      _
    $region15: #{tpu_custom_call.1} parent=1 // pred_check_branch
      %79 = sbr.rel (0) target = $region17
    $region16: #{tpu_custom_call.1} parent=1 // pred_region
      %s81 = ssub.s32 16, 16
      %82 = vsyncadd [#allocation4], %s81
      %s84 = sshll.u32 [#allocation5], 4
      %s85 = int_to_ptr.vmem [resolvable:$true] %s84
      %87 = dma.vmem_to_hbm [thread:$0]  %s85, 16, %s2, [#allocation4]
    $region17: #{tpu_custom_call.1} parent=1 // pred_fallthru
      _
    // Predicated region
    $region18: #{tpu_custom_call.1} parent=1 // pred_check
      _
    $region19: #{tpu_custom_call.1} parent=1 // pred_check_branch
      %89 = sbr.rel (0) target = $region21
    $region20: #{tpu_custom_call.1} parent=1 // pred_region
      %90 = dma.done [#allocation4], 16
    $region21: #{tpu_custom_call.1} parent=1 // pred_fallthru
      _
    %91 = vsyncpa [#allocation3], 1
    %92 = vsyncpa [#allocation4], 1

</llo_original>
